<compile_context>
chip_gen: v6e
topology: v6e:2x2x1
jax: 0.10.0
libtpu: 0.0.40
codegen_flags: <defaults>
</compile_context>

<pallas_src>
import functools

import jax
import jax.numpy as jnp
from jax import lax
from jax.experimental import pallas as pl
from jax.experimental.pallas import tpu as pltpu


def _qkv_proj_kernel(x_ref, w_ref, q_ref, k_ref, v_ref):
    # x_ref: (C, TS) image slab, w_ref: (3*hidden, C) fused 1x1-conv weight
    # q/k/v_ref: (hidden, TS) projected outputs (query scale already in Wq)
    x = x_ref[...]
    hidden = q_ref.shape[0]
    for i, o_ref in enumerate((q_ref, k_ref, v_ref)):
        w = w_ref[pl.ds(i * hidden, hidden), :]              # (hidden, C)
        o_ref[...] = jnp.dot(w, x,
                             preferred_element_type=jnp.float32
                             ).astype(o_ref.dtype)


def _attention_kernel(heads, dim_head, q_ref, k_ref, v_ref, wo_ref, b_ref,
                      o_ref, out_scratch):
    # q_ref:       (hidden, TQ)  query slab (scale folded into Wq)
    # k_ref/v_ref: (hidden, S)   all key/value positions of this image
    # wo_ref:      (C, hidden)   output 1x1-conv weight
    # b_ref:       (C, 1) f32    output 1x1-conv bias
    # o_ref:       (C, TQ)       lane-dense output slab
    # out_scratch: (hidden, TQ)  per-head attention outputs, stacked
    compute_dtype = v_ref.dtype

    for h in range(heads):                      # static, fully unrolled
        hs = pl.ds(h * dim_head, dim_head)
        q_h = q_ref[hs, :]                      # (dh, TQ)
        k_h = k_ref[hs, :]                      # (dh, S)
        v_h = v_ref[hs, :]                      # (dh, S)

        # sim[i, j] = sum_d q[d, i] * k[d, j]  -> lane-dense (TQ, S), f32 acc.
        sim = lax.dot_general(q_h, k_h, (((0,), (0,)), ((), ())),
                              preferred_element_type=jnp.float32)
        sim = sim - jnp.max(sim, axis=-1, keepdims=True)
        p = jnp.exp(sim)
        # EUP reciprocal instead of a per-element divide; the normalization
        # multiply rides on the bf16 cast the PV matmul needs anyway.
        inv_l = pl.reciprocal(jnp.sum(p, axis=-1, keepdims=True), approx=True)
        p = (p * inv_l).astype(compute_dtype)

        # out_h[d, i] = sum_j v[d, j] * p[i, j]
        out_h = lax.dot_general(v_h, p, (((1,), (1,)), ((), ())),
                                preferred_element_type=jnp.float32)   # (dh,TQ)
        out_scratch[hs, :] = out_h.astype(compute_dtype)

    # Output 1x1 conv over all heads at once: contraction depth = hidden.
    y = jnp.dot(wo_ref[...], out_scratch[...],
                preferred_element_type=jnp.float32)                   # (C, TQ)
    o_ref[...] = (y + b_ref[...]).astype(o_ref.dtype)


def attention_forward(x, w_qkv, w_out, b_out, *, heads=4, dim_head=32,
                      q_tile=128, s_tile=512, compute_dtype=jnp.bfloat16):
    """Fused Pallas forward pass of the Attention module.

    x:      (N, dim, H, W)             NCHW, same as the PyTorch module
    w_qkv:  (3*heads*dim_head, dim)    to_qkv 1x1-conv weight (squeezed)
    w_out:  (dim, heads*dim_head)      to_out 1x1-conv weight (squeezed)
    b_out:  (dim,)                     to_out bias
    Returns (N, dim, H, W) in x.dtype.
    """
    N, C, H, W = x.shape
    S = H * W
    hidden = heads * dim_head
    assert w_qkv.shape == (3 * hidden, C)
    assert w_out.shape == (C, hidden)
    assert b_out.shape == (C,)
    out_dtype = x.dtype
    scale = float(dim_head) ** -0.5
    cdt = jnp.dtype(compute_dtype)

    # Channels-first with the flattened spatial axis on lanes (free reshape).
    x_cs = x.reshape(N, C, S).astype(compute_dtype)

    # One-time weight prep: fold the query scale into Wq, cast to bf16.
    w_fused = jnp.concatenate([w_qkv[:hidden] * scale, w_qkv[hidden:]],
                              axis=0).astype(compute_dtype)            # (3h, C)
    wo = w_out.astype(compute_dtype)                                   # (C, h)
    bias = b_out.reshape(C, 1).astype(jnp.float32)

    # ---------- kernel 1: fused QKV projection (1x1 conv, no bias) ----------
    ts = S if S <= s_tile else s_tile
    assert ts == S or ts % 128 == 0
    num_s = pl.cdiv(S, ts)
    proj_cost = pl.CostEstimate(
        flops=int(2 * N * 3 * hidden * C * S),
        transcendentals=0,
        bytes_accessed=int(cdt.itemsize *
                           (N * C * S + 3 * hidden * C + 3 * N * hidden * S)))
    q, k, v = pl.pallas_call(
        _qkv_proj_kernel,
        out_shape=[jax.ShapeDtypeStruct((N, hidden, S), compute_dtype)
                   for _ in range(3)],
        grid=(N, num_s),
        in_specs=[
            pl.BlockSpec((None, C, ts), lambda b, si: (b, 0, si)),
            pl.BlockSpec((3 * hidden, C), lambda b, si: (0, 0)),
        ],
        out_specs=[pl.BlockSpec((None, hidden, ts), lambda b, si: (b, 0, si))
                   for _ in range(3)],
        compiler_params=pltpu.CompilerParams(
            dimension_semantics=("parallel", "parallel")),
        cost_estimate=proj_cost,
    )(x_cs, w_fused)

    # ---------- kernel 2: attention + output 1x1 conv (heads fused) ----------
    tq = S if S <= q_tile else q_tile
    assert tq == S or tq % 128 == 0
    num_q = pl.cdiv(S, tq)          # last query tile is padded; OOB writes
                                    # are masked, padded rows are harmless.

    # VMEM budget: double-buffered blocks + f32 score temporaries; clamp so
    # the scoped limit is valid on every generation (v7x has 64 MiB total).
    vmem_est = (2 * hidden * tq * cdt.itemsize            # q slab
                + 2 * 2 * hidden * S * cdt.itemsize       # k, v (full S)
                + 2 * C * hidden * cdt.itemsize           # wo
                + 2 * C * 128 * 4                         # bias (lane-padded)
                + 2 * C * tq * jnp.dtype(out_dtype).itemsize
                + hidden * tq * cdt.itemsize              # scratch
                + 4 * tq * S * 4)                         # sim / exp temps
    vmem_limit = int(min(max(2 * vmem_est, 32 * 1024 * 1024),
                         64 * 1024 * 1024))

    attn_cost = pl.CostEstimate(
        flops=int(2 * N * heads * 2 * S * S * dim_head
                  + 2 * N * C * hidden * S),
        transcendentals=int(N * heads * S * S),
        bytes_accessed=int(cdt.itemsize * (3 * N * hidden * S + C * hidden)
                           + 4 * C
                           + jnp.dtype(out_dtype).itemsize * N * C * S))

    kernel = functools.partial(_attention_kernel, heads, dim_head)
    out = pl.pallas_call(
        kernel,
        out_shape=jax.ShapeDtypeStruct((N, C, S), out_dtype),
        grid=(N, num_q),
        in_specs=[
            pl.BlockSpec((None, hidden, tq), lambda b, qi: (b, 0, qi)),
            pl.BlockSpec((None, hidden, S), lambda b, qi: (b, 0, 0)),
            pl.BlockSpec((None, hidden, S), lambda b, qi: (b, 0, 0)),
            pl.BlockSpec((C, hidden), lambda b, qi: (0, 0)),
            pl.BlockSpec((C, 1), lambda b, qi: (0, 0)),
        ],
        out_specs=pl.BlockSpec((None, C, tq), lambda b, qi: (b, 0, qi)),
        scratch_shapes=[pltpu.VMEM((hidden, tq), compute_dtype)],
        compiler_params=pltpu.CompilerParams(
            dimension_semantics=("parallel", "parallel"),
            vmem_limit_bytes=vmem_limit),
        cost_estimate=attn_cost,
    )(q, k, v, wo, bias)

    return out.reshape(N, C, H, W)


def _reference(x, w_qkv, w_out, b_out, heads, dim_head):
    """Plain-JAX reference matching the PyTorch Attention semantics (f32)."""
    N, C, H, W = x.shape
    S = H * W
    hidden = heads * dim_head
    scale = float(dim_head) ** -0.5
    hp = jax.lax.Precision.HIGHEST

    xf = x.reshape(N, C, S).astype(jnp.float32)
    qkv = jnp.einsum('oc,ncs->nos', w_qkv.astype(jnp.float32), xf, precision=hp)
    q, k, v = jnp.split(qkv, 3, axis=1)
    q = q.reshape(N, heads, dim_head, S) * scale
    k = k.reshape(N, heads, dim_head, S)
    v = v.reshape(N, heads, dim_head, S)

    sim = jnp.einsum('nhdi,nhdj->nhij', q, k, precision=hp)
    attn = jax.nn.softmax(sim, axis=-1)
    out = jnp.einsum('nhij,nhdj->nhid', attn, v, precision=hp)
    # rearrange 'b h (x y) d -> b (h d) x y'
    out = jnp.transpose(out, (0, 1, 3, 2)).reshape(N, hidden, S)
    y = jnp.einsum('oc,ncs->nos', w_out.astype(jnp.float32), out, precision=hp)
    y = y + b_out.astype(jnp.float32)[None, :, None]
    return y.reshape(N, C, H, W).astype(jnp.float32)


if __name__ == "__main__":
    N, dim, heads, dim_head, H, W = 2, 32, 4, 32, 16, 16
    hidden = heads * dim_head

    key = jax.random.PRNGKey(0)
    kx, kq, ko, kb = jax.random.split(key, 4)

    x = jax.random.normal(kx, (N, dim, H, W), jnp.float32)
    # Kaiming-uniform-like init for the two 1x1 convs.
    bq = 1.0 / (dim ** 0.5)
    w_qkv = jax.random.uniform(kq, (3 * hidden, dim), jnp.float32,
                               minval=-bq, maxval=bq)
    bo = 1.0 / (hidden ** 0.5)
    w_out = jax.random.uniform(ko, (dim, hidden), jnp.float32,
                               minval=-bo, maxval=bo)
    b_out = jax.random.uniform(kb, (dim,), jnp.float32, minval=-bo, maxval=bo)

    y = attention_forward(x, w_qkv, w_out, b_out, heads=heads,
                          dim_head=dim_head)
    y = jax.block_until_ready(y)

    ref = _reference(x, w_qkv, w_out, b_out, heads, dim_head)
    assert y.shape == (N, dim, H, W)
    max_err = float(jnp.max(jnp.abs(y.astype(jnp.float32) - ref)))
    # bf16 operands with f32 accumulation: tolerance accordingly.
    assert jnp.allclose(y.astype(jnp.float32), ref, atol=5e-3, rtol=5e-3), \
        f"max err {max_err}"

    print("KERNEL_OK")
</pallas_src>

<mosaic_0001>
module attributes {stable_mosaic.version = 11 : i64} {
  func.func @_qkv_proj_kernel(%arg0: i32, %arg1: i32, %arg2: memref<1x32x256xbf16, #tpu.memory_space<vmem>>, %arg3: memref<384x32xbf16, #tpu.memory_space<vmem>>, %arg4: memref<1x128x256xbf16, #tpu.memory_space<vmem>>, %arg5: memref<1x128x256xbf16, #tpu.memory_space<vmem>>, %arg6: memref<1x128x256xbf16, #tpu.memory_space<vmem>>) attributes {dimension_semantics = [#tpu.dimension_semantics<parallel>, #tpu.dimension_semantics<parallel>], iteration_bounds = array<i64: 2, 1>, scalar_prefetch = 0 : i64, scratch_operands = 0 : i64, tpu.core_type = #tpu.core_type<tc>, window_params = [{transform_indices = @transform_0, window_bounds = array<i64: 1, 32, 256>}, {pipeline_mode = #tpu.pipeline_mode<synchronous>, transform_indices = @transform_1, window_bounds = array<i64: 384, 32>}, {transform_indices = @transform_2, window_bounds = array<i64: 1, 128, 256>}, {transform_indices = @transform_3, window_bounds = array<i64: 1, 128, 256>}, {transform_indices = @transform_4, window_bounds = array<i64: 1, 128, 256>}]} {
    %c0 = arith.constant 0 : index
    %c0_0 = arith.constant 0 : index
    %c0_1 = arith.constant 0 : index
    %0 = vector.load %arg2[%c0, %c0_0, %c0_1] : memref<1x32x256xbf16, #tpu.memory_space<vmem>>, vector<1x32x256xbf16>
    %1 = vector.shape_cast %0 : vector<1x32x256xbf16> to vector<32x256xbf16>
    %c0_2 = arith.constant 0 : index
    %c0_3 = arith.constant 0 : index
    %2 = vector.load %arg3[%c0_2, %c0_3] : memref<384x32xbf16, #tpu.memory_space<vmem>>, vector<128x32xbf16>
    %cst = arith.constant dense<0.000000e+00> : vector<128x256xf32>
    %3 = tpu.matmul %2, %1, %cst {dimension_numbers = #tpu.dot_dimension_numbers<[1], [0], [0], [1], [0, 0, 1, 1], [], []>} : vector<128x32xbf16>, vector<32x256xbf16>, vector<128x256xf32> -> vector<128x256xf32>
    %4 = arith.truncf %3 : vector<128x256xf32> to vector<128x256xbf16>
    %c0_4 = arith.constant 0 : index
    %c0_5 = arith.constant 0 : index
    %c0_6 = arith.constant 0 : index
    %5 = vector.load %arg4[%c0_4, %c0_5, %c0_6] : memref<1x128x256xbf16, #tpu.memory_space<vmem>>, vector<1x128x256xbf16>
    %6 = vector.shape_cast %5 : vector<1x128x256xbf16> to vector<128x256xbf16>
    %7 = vector.shape_cast %4 : vector<128x256xbf16> to vector<1x128x256xbf16>
    tpu.vector_store %arg4[%c0_4, %c0_5, %c0_6], %7 {strides = array<i32>} : memref<1x128x256xbf16, #tpu.memory_space<vmem>>, vector<1x128x256xbf16>,
    %c128 = arith.constant 128 : index
    %c0_7 = arith.constant 0 : index
    %8 = vector.load %arg3[%c128, %c0_7] : memref<384x32xbf16, #tpu.memory_space<vmem>>, vector<128x32xbf16>
    %cst_8 = arith.constant dense<0.000000e+00> : vector<128x256xf32>
    %9 = tpu.matmul %8, %1, %cst_8 {dimension_numbers = #tpu.dot_dimension_numbers<[1], [0], [0], [1], [0, 0, 1, 1], [], []>} : vector<128x32xbf16>, vector<32x256xbf16>, vector<128x256xf32> -> vector<128x256xf32>
    %10 = arith.truncf %9 : vector<128x256xf32> to vector<128x256xbf16>
    %c0_9 = arith.constant 0 : index
    %c0_10 = arith.constant 0 : index
    %c0_11 = arith.constant 0 : index
    %11 = vector.load %arg5[%c0_9, %c0_10, %c0_11] : memref<1x128x256xbf16, #tpu.memory_space<vmem>>, vector<1x128x256xbf16>
    %12 = vector.shape_cast %11 : vector<1x128x256xbf16> to vector<128x256xbf16>
    %13 = vector.shape_cast %10 : vector<128x256xbf16> to vector<1x128x256xbf16>
    tpu.vector_store %arg5[%c0_9, %c0_10, %c0_11], %13 {strides = array<i32>} : memref<1x128x256xbf16, #tpu.memory_space<vmem>>, vector<1x128x256xbf16>,
    %c256 = arith.constant 256 : index
    %c0_12 = arith.constant 0 : index
    %14 = vector.load %arg3[%c256, %c0_12] : memref<384x32xbf16, #tpu.memory_space<vmem>>, vector<128x32xbf16>
    %cst_13 = arith.constant dense<0.000000e+00> : vector<128x256xf32>
    %15 = tpu.matmul %14, %1, %cst_13 {dimension_numbers = #tpu.dot_dimension_numbers<[1], [0], [0], [1], [0, 0, 1, 1], [], []>} : vector<128x32xbf16>, vector<32x256xbf16>, vector<128x256xf32> -> vector<128x256xf32>
    %16 = arith.truncf %15 : vector<128x256xf32> to vector<128x256xbf16>
    %c0_14 = arith.constant 0 : index
    %c0_15 = arith.constant 0 : index
    %c0_16 = arith.constant 0 : index
    %17 = vector.load %arg6[%c0_14, %c0_15, %c0_16] : memref<1x128x256xbf16, #tpu.memory_space<vmem>>, vector<1x128x256xbf16>
    %18 = vector.shape_cast %17 : vector<1x128x256xbf16> to vector<128x256xbf16>
    %19 = vector.shape_cast %16 : vector<128x256xbf16> to vector<1x128x256xbf16>
    tpu.vector_store %arg6[%c0_14, %c0_15, %c0_16], %19 {strides = array<i32>} : memref<1x128x256xbf16, #tpu.memory_space<vmem>>, vector<1x128x256xbf16>,
    return
  }
  func.func @transform_0(%arg0: i32, %arg1: i32) -> (i32, i32, i32) {
    %c0_i32 = arith.constant 0 : i32
    %c0_i32_0 = arith.constant 0 : i32
    return %arg0, %c0_i32, %arg1 : i32, i32, i32
  }
  func.func @transform_1(%arg0: i32, %arg1: i32) -> (i32, i32) {
    %c0_i32 = arith.constant 0 : i32
    %c0_i32_0 = arith.constant 0 : i32
    %c0_i32_1 = arith.constant 0 : i32
    return %c0_i32, %c0_i32_0 : i32, i32
  }
  func.func @transform_2(%arg0: i32, %arg1: i32) -> (i32, i32, i32) {
    %c0_i32 = arith.constant 0 : i32
    %c0_i32_0 = arith.constant 0 : i32
    return %arg0, %c0_i32, %arg1 : i32, i32, i32
  }
  func.func @transform_3(%arg0: i32, %arg1: i32) -> (i32, i32, i32) {
    %c0_i32 = arith.constant 0 : i32
    %c0_i32_0 = arith.constant 0 : i32
    return %arg0, %c0_i32, %arg1 : i32, i32, i32
  }
  func.func @transform_4(%arg0: i32, %arg1: i32) -> (i32, i32, i32) {
    %c0_i32 = arith.constant 0 : i32
    %c0_i32_0 = arith.constant 0 : i32
    return %arg0, %c0_i32, %arg1 : i32, i32, i32
  }
}

</mosaic_0001>

<llo_original>
// kernel: tpu_custom_call.1
$region0: #{tpu_custom_call.1}
  #allocation0 [shape = 'u32[]', space=smem, size = 0x4, offset = 0x4, fixed_abs, tag = 'smem constant byte address 0x4 - core index']
  #allocation1 [shape = 'u32[144,128]{1,0:T(1,128)}', space=vmem, size = 0x12000, scoped, tag = 'internal scratch']
  %s0 = inlined_call_operand.vmem [shape: bf16[2,32,256], index: 0, kind: input, shape index: {}]
  %s1 = inlined_call_operand.vmem [shape: bf16[384,32], index: 1, kind: input, shape index: {}]
  %s2 = inlined_call_operand.hbm [shape: bf16[2,128,256], index: 2, kind: output, shape index: {0}]
  %s3 = inlined_call_operand.hbm [shape: bf16[2,128,256], index: 3, kind: output, shape index: {1}]
  %s4 = inlined_call_operand.hbm [shape: bf16[2,128,256], index: 4, kind: output, shape index: {2}]
  %5 = xla_tuple %s2, %s3, %s4
  %s6 = sld [smem:[#allocation0]]
  $region57: #{tpu_custom_call.1} parent=0
    _
  %s8 = ssub.s32 1, %s6
  %s9 = scalar_select 0, %s8, %s6
  $region1: #{tpu_custom_call.1} parent=0
    #allocation2 [shape = 'u8[131072]{0}', space=vmem, size = 0x20000, scoped, tag = 'output window, operand 0']
    #allocation3 [shape = 's32[2]{0}', space=sflag, size = 0x8, scoped, tag = 'scoped memory for tpu_custom_call.1']
    #allocation4 [shape = 'u8[131072]{0}', space=vmem, size = 0x20000, scoped, tag = 'output window, operand 1']
    #allocation5 [shape = 's32[2]{0}', space=sflag, size = 0x8, scoped, tag = 'scoped memory for tpu_custom_call.1']
    #allocation6 [shape = 'u8[131072]{0}', space=vmem, size = 0x20000, scoped, tag = 'output window, operand 2']
    %10 = vsyncpa [#allocation3], 0
    %s11 = scalar_lea.sflag [#allocation3], 1
    %12 = vsyncpa %s11, 0
    %13 = vsyncpa [#allocation5], 0
    %s14 = scalar_lea.sflag [#allocation5], 1
    %15 = vsyncpa %s14, 0
    loop: start=0, step=1, limit=4
    $region2: #{tpu_custom_call.1} parent=1 // loop_pre_header
      _
    $region3: #{tpu_custom_call.1} parent=1 // loop_header
      %s17 = sphi 0, %s21
      %p18 = scmp.ge.s32.totalorder %s17, 4
      %s24 = sphi 0, %s36
      %s25 = sphi 0, %s32
      %s26 = sphi 0, %s24
      %s27 = sphi 0, %s25
      %s28 = sphi 0, %s26
      %s29 = sphi 0, %s27
      %s41 = sphi 0, %s43
      %s44 = sphi 0, %s41
      %s45 = sphi 0, %s44
      %s61 = sphi 0, %s45
      %s65 = sphi 0, %s65
      %s67 = sphi 0, %s65
      %s68 = sphi 0, %s67
      %s82 = sphi 0, %s68
      %s90 = sphi 0, %s92
      %s93 = sphi 0, %s90
      %s94 = sphi 0, %s93
      %s110 = sphi 0, %s94
      %s118 = sphi 0, %s120
      %s121 = sphi 0, %s118
      %s122 = sphi 0, %s121
      %s138 = sphi 0, %s122
      %s146 = sphi 0, %s148
      %s149 = sphi 0, %s146
      %s150 = sphi 0, %s149
      %s166 = sphi 0, %s150
    $region4: #{tpu_custom_call.1} parent=1 // loop_header_branch
      %20 = sbr.rel (%p18) target = $region8
    $region5: #{tpu_custom_call.1} parent=1 // loop_body
      %s22 = ssub.s32 %s17, 1
      %s23 = ssub.s32 %s17, 2
      %s30 = sadd.s32 1, %s25
      %p31 = scmp.ge.s32.totalorder %s30, 1
      %s32 = scalar_select %p31, 0, %s30
      %s33 = sadd.s32 1, %s24
      %s34 = scalar_select %p31, %s33, %s24
      %p35 = scmp.ge.s32.totalorder %s34, 2
      %s36 = scalar_select %p35, 0, %s34
      %s37 = ssub.s32 %s24, %s36
      %s38 = ssub.s32 %s25, %s32
      %s39 = sor.u32 %s37, %s38
      %p40 = scmp.eq.s32.totalorder %s39, 0
      %s42 = sadd.s32 %s41, 1
      %s43 = scalar_select %p40, %s41, %s42
      %p46 = pneg %p40
      %p47 = scmp.eq.s32.totalorder %s17, 1
      %p48 = por %p46, %p47
      %p49 = scmp.ne.s32.totalorder %s41, %s44
      %p50 = scmp.eq.s32.totalorder %s17, 0
      %p51 = por %p49, %p50
      %p52 = scmp.ne.s32.totalorder %s41, %s44
      %p53 = scmp.eq.s32.totalorder %s22, 1
      %p54 = por %p52, %p53
      %p55 = scmp.ne.s32.totalorder %s44, %s45
      %p56 = scmp.eq.s32.totalorder %s22, 0
      %p57 = por %p55, %p56
      %p58 = scmp.ne.s32.totalorder %s44, %s45
      %p59 = scmp.eq.s32.totalorder %s23, 1
      %p60 = por %p58, %p59
      %p62 = scmp.ne.s32.totalorder %s45, %s61
      %p63 = scmp.eq.s32.totalorder %s23, 0
      %p64 = por %p62, %p63
      %s66 = sadd.s32 %s65, 1
      %p69 = scmp.eq.s32.totalorder %s17, 1
      %p70 = scmp.ne.s32.totalorder %s65, %s67
      %p71 = scmp.eq.s32.totalorder %s17, 0
      %p72 = por %p70, %p71
      %p73 = scmp.ne.s32.totalorder %s65, %s67
      %p74 = scmp.eq.s32.totalorder %s22, 1
      %p75 = por %p73, %p74
      %p76 = scmp.ne.s32.totalorder %s67, %s68
      %p77 = scmp.eq.s32.totalorder %s22, 0
      %p78 = por %p76, %p77
      %p79 = scmp.ne.s32.totalorder %s67, %s68
      %p80 = scmp.eq.s32.totalorder %s23, 1
      %p81 = por %p79, %p80
      %p83 = scmp.ne.s32.totalorder %s68, %s82
      %p84 = scmp.eq.s32.totalorder %s23, 0
      %p85 = por %p83, %p84
      %s86 = ssub.s32 %s24, %s36
      %s87 = ssub.s32 %s25, %s32
      %s88 = sor.u32 %s86, %s87
      %p89 = scmp.eq.s32.totalorder %s88, 0
      %s91 = sadd.s32 %s90, 1
      %s92 = scalar_select %p89, %s90, %s91
      %p95 = pneg %p89
      %p96 = scmp.eq.s32.totalorder %s17, 1
      %p97 = por %p95, %p96
      %p98 = scmp.ne.s32.totalorder %s90, %s93
      %p99 = scmp.eq.s32.totalorder %s17, 0
      %p100 = por %p98, %p99
      %p101 = scmp.ne.s32.totalorder %s90, %s93
      %p102 = scmp.eq.s32.totalorder %s22, 1
      %p103 = por %p101, %p102
      %p104 = scmp.ne.s32.totalorder %s93, %s94
      %p105 = scmp.eq.s32.totalorder %s22, 0
      %p106 = por %p104, %p105
      %p107 = scmp.ne.s32.totalorder %s93, %s94
      %p108 = scmp.eq.s32.totalorder %s23, 1
      %p109 = por %p107, %p108
      %p111 = scmp.ne.s32.totalorder %s94, %s110
      %p112 = scmp.eq.s32.totalorder %s23, 0
      %p113 = por %p111, %p112
      %s114 = ssub.s32 %s24, %s36
      %s115 = ssub.s32 %s25, %s32
      %s116 = sor.u32 %s114, %s115
      %p117 = scmp.eq.s32.totalorder %s116, 0
      %s119 = sadd.s32 %s118, 1
      %s120 = scalar_select %p117, %s118, %s119
      %p123 = pneg %p117
      %p124 = scmp.eq.s32.totalorder %s17, 1
      %p125 = por %p123, %p124
      %p126 = scmp.ne.s32.totalorder %s118, %s121
      %p127 = scmp.eq.s32.totalorder %s17, 0
      %p128 = por %p126, %p127
      %p129 = scmp.ne.s32.totalorder %s118, %s121
      %p130 = scmp.eq.s32.totalorder %s22, 1
      %p131 = por %p129, %p130
      %p132 = scmp.ne.s32.totalorder %s121, %s122
      %p133 = scmp.eq.s32.totalorder %s22, 0
      %p134 = por %p132, %p133
      %p135 = scmp.ne.s32.totalorder %s121, %s122
      %p136 = scmp.eq.s32.totalorder %s23, 1
      %p137 = por %p135, %p136
      %p139 = scmp.ne.s32.totalorder %s122, %s138
      %p140 = scmp.eq.s32.totalorder %s23, 0
      %p141 = por %p139, %p140
      %s142 = ssub.s32 %s24, %s36
      %s143 = ssub.s32 %s25, %s32
      %s144 = sor.u32 %s142, %s143
      %p145 = scmp.eq.s32.totalorder %s144, 0
      %s147 = sadd.s32 %s146, 1
      %s148 = scalar_select %p145, %s146, %s147
      %p151 = pneg %p145
      %p152 = scmp.eq.s32.totalorder %s17, 1
      %p153 = por %p151, %p152
      %p154 = scmp.ne.s32.totalorder %s146, %s149
      %p155 = scmp.eq.s32.totalorder %s17, 0
      %p156 = por %p154, %p155
      %p157 = scmp.ne.s32.totalorder %s146, %s149
      %p158 = scmp.eq.s32.totalorder %s22, 1
      %p159 = por %p157, %p158
      %p160 = scmp.ne.s32.totalorder %s149, %s150
      %p161 = scmp.eq.s32.totalorder %s22, 0
      %p162 = por %p160, %p161
      %p163 = scmp.ne.s32.totalorder %s149, %s150
      %p164 = scmp.eq.s32.totalorder %s23, 1
      %p165 = por %p163, %p164
      %p167 = scmp.ne.s32.totalorder %s150, %s166
      %p168 = scmp.eq.s32.totalorder %s23, 0
      %p169 = por %p167, %p168
      %p170 = scmp.le.s32.totalorder 1, %s17
      %p171 = scmp.lt.s32.totalorder %s17, 3
      %p172 = pnand %p170, %p171
      %p173 = pneg %p172
      // Predicated region
      $region9: #{tpu_custom_call.1} parent=5 // pred_check
        _
      $region10: #{tpu_custom_call.1} parent=5 // pred_check_branch
        %175 = sbr.rel (%p172) target = $region12
      $region11: #{tpu_custom_call.1} parent=5 // pred_region
        %s176 = ssub.s32 %s17, 1
        // Predicated region
        $region13: #{tpu_custom_call.1} parent=11 // pred_check
          %p177 = pneg %p78
        $region14: #{tpu_custom_call.1} parent=11 // pred_check_branch
          %179 = sbr.rel (%p177) target = $region16
        $region15: #{tpu_custom_call.1} parent=11 // pred_region
          _
        $region16: #{tpu_custom_call.1} parent=11 // pred_fallthru
          _
      $region12: #{tpu_custom_call.1} parent=5 // pred_fallthru
        _
      %p180 = scmp.lt.s32.totalorder %s17, 2
      // Predicated region
      $region17: #{tpu_custom_call.1} parent=5 // pred_check
        %p181 = pneg %p180
      $region18: #{tpu_custom_call.1} parent=5 // pred_check_branch
        %183 = sbr.rel (%p181) target = $region20
      $region19: #{tpu_custom_call.1} parent=5 // pred_region
        // Predicated region
        $region21: #{tpu_custom_call.1} parent=19 // pred_check
          %p184 = pneg %p51
        $region22: #{tpu_custom_call.1} parent=19 // pred_check_branch
          %186 = sbr.rel (%p184) target = $region24
        $region23: #{tpu_custom_call.1} parent=19 // pred_region
          %s187 = smul.u32 2, %s25
          %p188 = scmp.lt.s32.totalorder %s24, 1
          %s189 = scalar_select %p188, %s24, 1
          %p190 = scmp.lt.s32.totalorder %s187, 1
          %s191 = scalar_select %p190, %s187, 1
          %s192 = smul.addr %s189, 8
          %s193 = sadd.s32 %s191, %s192
          %s194 = smul.addr %s193, 4
          %s195 = scalar_lea.vmem %s0, %s194
          %s196 = smul.u32 2, %s25
        $region24: #{tpu_custom_call.1} parent=19 // pred_fallthru
          _
      $region20: #{tpu_custom_call.1} parent=5 // pred_fallthru
        _
      %p197 = scmp.le.s32.totalorder 1, %s17
      %p198 = scmp.lt.s32.totalorder %s17, 3
      %p199 = pnand %p197, %p198
      %p200 = pneg %p199
      // Predicated region
      $region25: #{tpu_custom_call.1} parent=5 // pred_check
        _
      $region26: #{tpu_custom_call.1} parent=5 // pred_check_branch
        %202 = sbr.rel (%p199) target = $region28
      $region27: #{tpu_custom_call.1} parent=5 // pred_region
        %s203 = ssub.s32 %s17, 1
        %s204 = smul.u32 2, %s27
        %p205 = scmp.lt.s32.totalorder %s26, 1
        %s206 = scalar_select %p205, %s26, 1
        %p207 = scmp.lt.s32.totalorder %s204, 1
        %s208 = scalar_select %p207, %s204, 1
        %s209 = smul.addr %s206, 8
        %s210 = sadd.s32 %s208, %s209
        %s211 = smul.addr %s210, 4
        %s212 = scalar_lea.vmem %s0, %s211
        %p213 = pneg %p57
        %p214 = pneg %p54
        %p215 = pneg %p78
        %p216 = pneg %p75
        %p217 = pneg %p106
        %p218 = pneg %p103
        %s219 = sand.u32 %s93, 1
        %s220 = scalar_lea.sflag [#allocation3], %s219
        %s221 = sand.u32 %s93, 1
        %s222 = smul.addr %s221, 128
        %s223 = scalar_lea.vmem [#allocation2], %s222
        %p224 = pneg %p134
        %p225 = pneg %p131
        %s226 = sand.u32 %s22, 1
        %s227 = scalar_lea.sflag [#allocation5], %s226
        %s228 = sand.u32 %s121, 1
        %s229 = smul.addr %s228, 128
        %s230 = scalar_lea.vmem [#allocation4], %s229
        %p231 = pneg %p162
        %p232 = pneg %p159
        %s233 = sand.u32 %s22, 1
        %s234 = scalar_lea.sflag [#allocation5], %s233
        %s235 = sand.u32 %s149, 1
        %s236 = smul.addr %s235, 128
        %s237 = scalar_lea.vmem [#allocation6], %s236
        %s238 = smul.u32 2, %s27
        %p239 = scmp.lt.s32.totalorder %s26, 1
        %s240 = scalar_select %p239, %s26, 1
        %p241 = scmp.lt.s32.totalorder %s238, 1
        %s242 = scalar_select %p241, %s238, 1
        %s243 = smul.addr %s240, 8
        %s244 = sadd.s32 %s242, %s243
        %s245 = smul.addr %s244, 4
        %s246 = scalar_lea.vmem %s0, %s245
        %s247 = smul.u32 2, %s27
        %s248 = smul.u32 2, %s27
        %s249 = smul.u32 2, %s27
        %s250 = smul.u32 2, %s27
        %v252 = vld [vmem:[%s246] sm:$0xff]
        %v253 = vld [vmem:[%s246 + $0x8] sm:$0xff]
        %v254 = vld [vmem:[%s246 + $0x10] sm:$0xff]
        %v255 = vld [vmem:[%s246 + $0x18] sm:$0xff]
        %v256 = vld [vmem:[%s1] sm:$0xf]
        %v257 = vld [vmem:[%s1 + $0x4] sm:$0xf]
        %v258 = vld [vmem:[%s1 + $0x8] sm:$0xf]
        %v259 = vld [vmem:[%s1 + $0xc] sm:$0xf]
        %v260 = vld [vmem:[%s1 + $0x10] sm:$0xf]
        %v261 = vld [vmem:[%s1 + $0x14] sm:$0xf]
        %v262 = vld [vmem:[%s1 + $0x18] sm:$0xf]
        %v263 = vld [vmem:[%s1 + $0x1c] sm:$0xf]
        %v264 = vld [vmem:[%s1 + $0x20] sm:$0xf]
        %v265 = vld [vmem:[%s1 + $0x24] sm:$0xf]
        %v266 = vld [vmem:[%s1 + $0x28] sm:$0xf]
        %v267 = vld [vmem:[%s1 + $0x2c] sm:$0xf]
        %v268 = vld [vmem:[%s1 + $0x30] sm:$0xf]
        %v269 = vld [vmem:[%s1 + $0x34] sm:$0xf]
        %v270 = vld [vmem:[%s1 + $0x38] sm:$0xf]
        %v271 = vld [vmem:[%s1 + $0x3c] sm:$0xf]
        %v288 = vunpack.c.l.b16 %v256
        %v289 = vunpack.c.l.b16 %v257
        %v290 = vunpack.c.l.b16 %v258
        %v291 = vunpack.c.l.b16 %v259
        %v292 = vunpack.c.l.b16 %v260
        %v293 = vunpack.c.l.b16 %v261
        %v294 = vunpack.c.l.b16 %v262
        %v295 = vunpack.c.l.b16 %v263
        %v296 = vunpack.c.l.b16 %v264
        %v297 = vunpack.c.l.b16 %v265
        %v298 = vunpack.c.l.b16 %v266
        %v299 = vunpack.c.l.b16 %v267
        %v300 = vunpack.c.l.b16 %v268
        %v301 = vunpack.c.l.b16 %v269
        %v302 = vunpack.c.l.b16 %v270
        %v303 = vunpack.c.l.b16 %v271
        %v304 = vpack.c.b16 %v289, %v288
        %v305 = vpack.c.b16 %v291, %v290
        %v306 = vpack.c.b16 %v293, %v292
        %v307 = vpack.c.b16 %v295, %v294
        %v308 = vpack.c.b16 %v297, %v296
        %v309 = vpack.c.b16 %v299, %v298
        %v310 = vpack.c.b16 %v301, %v300
        %v311 = vpack.c.b16 %v303, %v302
        %v316 = vunpack.c.l.b16 %v252
        %v317 = vunpack.c.h.b16 %v252
        %v318 = vunpack.c.l.b16 %v253
        %v319 = vunpack.c.h.b16 %v253
        %v320 = vunpack.c.l.b16 %v254
        %v321 = vunpack.c.h.b16 %v254
        %v322 = vunpack.c.l.b16 %v255
        %v323 = vunpack.c.h.b16 %v255
        %v324 = vpack.c.b16 %v318, %v316
        %v325 = vpack.c.b16 %v319, %v317
        %v326 = vpack.c.b16 %v322, %v320
        %v327 = vpack.c.b16 %v323, %v321
        %vm332 = vcmask 261120
        %v334 = vsel %vm332, %v304, 0
        %v337 = vsel %vm332, %v305, 0
        %v340 = vsel %vm332, %v306, 0
        %v343 = vsel %vm332, %v307, 0
        %v346 = vsel %vm332, %v308, 0
        %v349 = vsel %vm332, %v309, 0
        %v352 = vsel %vm332, %v310, 0
        %v355 = vsel %vm332, %v311, 0
        %357 = vmatprep.subr.bf16.mxu0 0
        %358 = vmatpush1.bf16.msra.mxu0 0
        %359 = vmatprep.subr.bf16.mxu0 0
        %360 = vmatpush1.bf16.msra.mxu0 0
        %361 = vmatprep.subr.bf16.mxu0 0
        %362 = vmatpush1.bf16.msra.mxu0 0
        %363 = vmatprep.subr.bf16.mxu0 0
        %364 = vmatpush1.bf16.msra.mxu0 0
        %365 = vmatprep.subr.bf16.mxu0 0
        %366 = vmatpush1.bf16.msra.mxu0 0
        %367 = vmatprep.subr.bf16.mxu0 0
        %368 = vmatpush1.bf16.msra.mxu0 0
        %369 = vmatprep.subr.bf16.mxu0 %v327
        %370 = vmatpush1.bf16.msra.mxu0 %v326
        %371 = vmatprep.subr.bf16.mxu0 %v325
        %372 = vmatpush1.bf16.msra.mxu0 %v324
        %373 = vmatprep.subr.bf16.mxu0 0
        %374 = vmatpush2.bf16.msra.mxu0 0
        %375 = vmatprep.subr.bf16.mxu0 0
        %376 = vmatpush2.bf16.msra.mxu0 0
        %377 = vmatprep.subr.bf16.mxu0 0
        %378 = vmatpush2.bf16.msra.mxu0 0
        %379 = vmatprep.subr.bf16.mxu0 0
        %380 = vmatpush2.bf16.msra.mxu0 0
        %381 = vmatprep.subr.bf16.mxu0 0
        %382 = vmatpush2.bf16.msra.mxu0 0
        %383 = vmatprep.subr.bf16.mxu0 0
        %384 = vmatpush2.bf16.msra.mxu0 0
        %385 = vmatprep.subr.bf16.mxu0 0
        %386 = vmatpush2.bf16.msra.mxu0 0
        %387 = vmatprep.subr.bf16.mxu0 0
        %388 = vmatpush2.bf16.msra.mxu0 0
        %389 = vmatprep.mubr.bf16.mxu0 0
        %390 = vmatmul.mubr.bf16.gmra.mxu0 %v334
        %v391 = vpop.f32.mrf.mxu0
        %v392 = vadd.f32 0.0, %v391
        %v393 = vpop.f32.mrf.mxu0
        %v394 = vadd.f32 0.0, %v393
        %v395 = vpop.f32.mrf.mxu0
        %v396 = vadd.f32 0.0, %v395
        %v397 = vpop.f32.mrf.mxu0
        %v398 = vadd.f32 0.0, %v397
        %399 = vmatprep.mubr.bf16.mxu0 0
        %400 = vmatmul.mubr.bf16.gmra.mxu0 %v337
        %v401 = vpop.f32.mrf.mxu0
        %v402 = vadd.f32 0.0, %v401
        %v403 = vpop.f32.mrf.mxu0
        %v404 = vadd.f32 0.0, %v403
        %v405 = vpop.f32.mrf.mxu0
        %v406 = vadd.f32 0.0, %v405
        %v407 = vpop.f32.mrf.mxu0
        %v408 = vadd.f32 0.0, %v407
        %409 = vmatprep.mubr.bf16.mxu0 0
        %410 = vmatmul.mubr.bf16.gmra.mxu0 %v340
        %v411 = vpop.f32.mrf.mxu0
        %v412 = vadd.f32 0.0, %v411
        %v413 = vpop.f32.mrf.mxu0
        %v414 = vadd.f32 0.0, %v413
        %v415 = vpop.f32.mrf.mxu0
        %v416 = vadd.f32 0.0, %v415
        %v417 = vpop.f32.mrf.mxu0
        %v418 = vadd.f32 0.0, %v417
        %419 = vmatprep.mubr.bf16.mxu0 0
        %420 = vmatmul.mubr.bf16.gmra.mxu0 %v343
        %v421 = vpop.f32.mrf.mxu0
        %v422 = vadd.f32 0.0, %v421
        %v423 = vpop.f32.mrf.mxu0
        %v424 = vadd.f32 0.0, %v423
        %v425 = vpop.f32.mrf.mxu0
        %v426 = vadd.f32 0.0, %v425
        %v427 = vpop.f32.mrf.mxu0
        %v428 = vadd.f32 0.0, %v427
        %429 = vmatprep.mubr.bf16.mxu0 0
        %430 = vmatmul.mubr.bf16.gmra.mxu0 %v346
        %v431 = vpop.f32.mrf.mxu0
        %v432 = vadd.f32 0.0, %v431
        %v433 = vpop.f32.mrf.mxu0
        %v434 = vadd.f32 0.0, %v433
        %v435 = vpop.f32.mrf.mxu0
        %v436 = vadd.f32 0.0, %v435
        %v437 = vpop.f32.mrf.mxu0
        %v438 = vadd.f32 0.0, %v437
        %439 = vmatprep.mubr.bf16.mxu0 0
        %440 = vmatmul.mubr.bf16.gmra.mxu0 %v349
        %v441 = vpop.f32.mrf.mxu0
        %v442 = vadd.f32 0.0, %v441
        %v443 = vpop.f32.mrf.mxu0
        %v444 = vadd.f32 0.0, %v443
        %v445 = vpop.f32.mrf.mxu0
        %v446 = vadd.f32 0.0, %v445
        %v447 = vpop.f32.mrf.mxu0
        %v448 = vadd.f32 0.0, %v447
        %449 = vmatprep.mubr.bf16.mxu0 0
        %450 = vmatmul.mubr.bf16.gmra.mxu0 %v352
        %v451 = vpop.f32.mrf.mxu0
        %v452 = vadd.f32 0.0, %v451
        %v453 = vpop.f32.mrf.mxu0
        %v454 = vadd.f32 0.0, %v453
        %v455 = vpop.f32.mrf.mxu0
        %v456 = vadd.f32 0.0, %v455
        %v457 = vpop.f32.mrf.mxu0
        %v458 = vadd.f32 0.0, %v457
        %459 = vmatprep.mubr.bf16.mxu0 0
        %460 = vmatmul.mubr.bf16.gmra.mxu0 %v355
        %v461 = vpop.f32.mrf.mxu0
        %v462 = vadd.f32 0.0, %v461
        %v463 = vpop.f32.mrf.mxu0
        %v464 = vadd.f32 0.0, %v463
        %v465 = vpop.f32.mrf.mxu0
        %v466 = vadd.f32 0.0, %v465
        %v467 = vpop.f32.mrf.mxu0
        %v468 = vadd.f32 0.0, %v467
        %469 = vdwg.mxu0
        %v470 = vpack.c.bf16 %v396, %v392
        %v471 = vpack.c.bf16 %v398, %v394
        %v472 = vpack.c.bf16 %v406, %v402
        %v473 = vpack.c.bf16 %v408, %v404
        %v474 = vpack.c.bf16 %v416, %v412
        %v475 = vpack.c.bf16 %v418, %v414
        %v476 = vpack.c.bf16 %v426, %v422
        %v477 = vpack.c.bf16 %v428, %v424
        %v478 = vpack.c.bf16 %v436, %v432
        %v479 = vpack.c.bf16 %v438, %v434
        %v480 = vpack.c.bf16 %v446, %v442
        %v481 = vpack.c.bf16 %v448, %v444
        %v482 = vpack.c.bf16 %v456, %v452
        %v483 = vpack.c.bf16 %v458, %v454
        %v484 = vpack.c.bf16 %v466, %v462
        %v485 = vpack.c.bf16 %v468, %v464
        %v502 = vunpack.c.l.b16 %v470
        %v503 = vunpack.c.l.b16 %v471
        %v504 = vunpack.c.h.b16 %v470
        %v505 = vunpack.c.h.b16 %v471
        %v506 = vunpack.c.l.b16 %v472
        %v507 = vunpack.c.l.b16 %v473
        %v508 = vunpack.c.h.b16 %v472
        %v509 = vunpack.c.h.b16 %v473
        %v510 = vunpack.c.l.b16 %v474
        %v511 = vunpack.c.l.b16 %v475
        %v512 = vunpack.c.h.b16 %v474
        %v513 = vunpack.c.h.b16 %v475
        %v514 = vunpack.c.l.b16 %v476
        %v515 = vunpack.c.l.b16 %v477
        %v516 = vunpack.c.h.b16 %v476
        %v517 = vunpack.c.h.b16 %v477
        %v518 = vunpack.c.l.b16 %v478
        %v519 = vunpack.c.l.b16 %v479
        %v520 = vunpack.c.h.b16 %v478
        %v521 = vunpack.c.h.b16 %v479
        %v522 = vunpack.c.l.b16 %v480
        %v523 = vunpack.c.l.b16 %v481
        %v524 = vunpack.c.h.b16 %v480
        %v525 = vunpack.c.h.b16 %v481
        %v526 = vunpack.c.l.b16 %v482
        %v527 = vunpack.c.l.b16 %v483
        %v528 = vunpack.c.h.b16 %v482
        %v529 = vunpack.c.h.b16 %v483
        %v530 = vunpack.c.l.b16 %v484
        %v531 = vunpack.c.l.b16 %v485
        %v532 = vunpack.c.h.b16 %v484
        %v533 = vunpack.c.h.b16 %v485
        %v534 = vpack.c.b16 %v503, %v502
        %v535 = vpack.c.b16 %v505, %v504
        %v536 = vpack.c.b16 %v507, %v506
        %v537 = vpack.c.b16 %v509, %v508
        %v538 = vpack.c.b16 %v511, %v510
        %v539 = vpack.c.b16 %v513, %v512
        %v540 = vpack.c.b16 %v515, %v514
        %v541 = vpack.c.b16 %v517, %v516
        %v542 = vpack.c.b16 %v519, %v518
        %v543 = vpack.c.b16 %v521, %v520
        %v544 = vpack.c.b16 %v523, %v522
        %v545 = vpack.c.b16 %v525, %v524
        %v546 = vpack.c.b16 %v527, %v526
        %v547 = vpack.c.b16 %v529, %v528
        %v548 = vpack.c.b16 %v531, %v530
        %v549 = vpack.c.b16 %v533, %v532
        %566 = vst [vmem:[%s223] sm:$0xff] %v534
        %567 = vst [vmem:[%s223 + $0x8] sm:$0xff] %v535
        %568 = vst [vmem:[%s223 + $0x10] sm:$0xff] %v536
        %569 = vst [vmem:[%s223 + $0x18] sm:$0xff] %v537
        %570 = vst [vmem:[%s223 + $0x20] sm:$0xff] %v538
        %571 = vst [vmem:[%s223 + $0x28] sm:$0xff] %v539
        %572 = vst [vmem:[%s223 + $0x30] sm:$0xff] %v540
        %573 = vst [vmem:[%s223 + $0x38] sm:$0xff] %v541
        %574 = vst [vmem:[%s223 + $0x40] sm:$0xff] %v542
        %575 = vst [vmem:[%s223 + $0x48] sm:$0xff] %v543
        %576 = vst [vmem:[%s223 + $0x50] sm:$0xff] %v544
        %577 = vst [vmem:[%s223 + $0x58] sm:$0xff] %v545
        %578 = vst [vmem:[%s223 + $0x60] sm:$0xff] %v546
        %579 = vst [vmem:[%s223 + $0x68] sm:$0xff] %v547
        %580 = vst [vmem:[%s223 + $0x70] sm:$0xff] %v548
        %581 = vst [vmem:[%s223 + $0x78] sm:$0xff] %v549
        %v582 = vld [vmem:[%s1 + $0x40] sm:$0xf]
        %v583 = vld [vmem:[%s1 + $0x44] sm:$0xf]
        %v584 = vld [vmem:[%s1 + $0x48] sm:$0xf]
        %v585 = vld [vmem:[%s1 + $0x4c] sm:$0xf]
        %v586 = vld [vmem:[%s1 + $0x50] sm:$0xf]
        %v587 = vld [vmem:[%s1 + $0x54] sm:$0xf]
        %v588 = vld [vmem:[%s1 + $0x58] sm:$0xf]
        %v589 = vld [vmem:[%s1 + $0x5c] sm:$0xf]
        %v590 = vld [vmem:[%s1 + $0x60] sm:$0xf]
        %v591 = vld [vmem:[%s1 + $0x64] sm:$0xf]
        %v592 = vld [vmem:[%s1 + $0x68] sm:$0xf]
        %v593 = vld [vmem:[%s1 + $0x6c] sm:$0xf]
        %v594 = vld [vmem:[%s1 + $0x70] sm:$0xf]
        %v595 = vld [vmem:[%s1 + $0x74] sm:$0xf]
        %v596 = vld [vmem:[%s1 + $0x78] sm:$0xf]
        %v597 = vld [vmem:[%s1 + $0x7c] sm:$0xf]
        %v614 = vunpack.c.l.b16 %v582
        %v615 = vunpack.c.l.b16 %v583
        %v616 = vunpack.c.l.b16 %v584
        %v617 = vunpack.c.l.b16 %v585
        %v618 = vunpack.c.l.b16 %v586
        %v619 = vunpack.c.l.b16 %v587
        %v620 = vunpack.c.l.b16 %v588
        %v621 = vunpack.c.l.b16 %v589
        %v622 = vunpack.c.l.b16 %v590
        %v623 = vunpack.c.l.b16 %v591
        %v624 = vunpack.c.l.b16 %v592
        %v625 = vunpack.c.l.b16 %v593
        %v626 = vunpack.c.l.b16 %v594
        %v627 = vunpack.c.l.b16 %v595
        %v628 = vunpack.c.l.b16 %v596
        %v629 = vunpack.c.l.b16 %v597
        %v630 = vpack.c.b16 %v615, %v614
        %v631 = vpack.c.b16 %v617, %v616
        %v632 = vpack.c.b16 %v619, %v618
        %v633 = vpack.c.b16 %v621, %v620
        %v634 = vpack.c.b16 %v623, %v622
        %v635 = vpack.c.b16 %v625, %v624
        %v636 = vpack.c.b16 %v627, %v626
        %v637 = vpack.c.b16 %v629, %v628
        %v639 = vsel %vm332, %v630, 0
        %v642 = vsel %vm332, %v631, 0
        %v645 = vsel %vm332, %v632, 0
        %v648 = vsel %vm332, %v633, 0
        %v651 = vsel %vm332, %v634, 0
        %v654 = vsel %vm332, %v635, 0
        %v657 = vsel %vm332, %v636, 0
        %v660 = vsel %vm332, %v637, 0
        %662 = vmatprep.subr.bf16.mxu0 0
        %663 = vmatpush1.bf16.msra.mxu0 0
        %664 = vmatprep.subr.bf16.mxu0 0
        %665 = vmatpush1.bf16.msra.mxu0 0
        %666 = vmatprep.subr.bf16.mxu0 0
        %667 = vmatpush1.bf16.msra.mxu0 0
        %668 = vmatprep.subr.bf16.mxu0 0
        %669 = vmatpush1.bf16.msra.mxu0 0
        %670 = vmatprep.subr.bf16.mxu0 0
        %671 = vmatpush1.bf16.msra.mxu0 0
        %672 = vmatprep.subr.bf16.mxu0 0
        %673 = vmatpush1.bf16.msra.mxu0 0
        %674 = vmatprep.subr.bf16.mxu0 %v327
        %675 = vmatpush1.bf16.msra.mxu0 %v326
        %676 = vmatprep.subr.bf16.mxu0 %v325
        %677 = vmatpush1.bf16.msra.mxu0 %v324
        %678 = vmatprep.subr.bf16.mxu0 0
        %679 = vmatpush2.bf16.msra.mxu0 0
        %680 = vmatprep.subr.bf16.mxu0 0
        %681 = vmatpush2.bf16.msra.mxu0 0
        %682 = vmatprep.subr.bf16.mxu0 0
        %683 = vmatpush2.bf16.msra.mxu0 0
        %684 = vmatprep.subr.bf16.mxu0 0
        %685 = vmatpush2.bf16.msra.mxu0 0
        %686 = vmatprep.subr.bf16.mxu0 0
        %687 = vmatpush2.bf16.msra.mxu0 0
        %688 = vmatprep.subr.bf16.mxu0 0
        %689 = vmatpush2.bf16.msra.mxu0 0
        %690 = vmatprep.subr.bf16.mxu0 0
        %691 = vmatpush2.bf16.msra.mxu0 0
        %692 = vmatprep.subr.bf16.mxu0 0
        %693 = vmatpush2.bf16.msra.mxu0 0
        %694 = vmatprep.mubr.bf16.mxu0 0
        %695 = vmatmul.mubr.bf16.gmra.mxu0 %v639
        %v696 = vpop.f32.mrf.mxu0
        %v697 = vadd.f32 0.0, %v696
        %v698 = vpop.f32.mrf.mxu0
        %v699 = vadd.f32 0.0, %v698
        %v700 = vpop.f32.mrf.mxu0
        %v701 = vadd.f32 0.0, %v700
        %v702 = vpop.f32.mrf.mxu0
        %v703 = vadd.f32 0.0, %v702
        %704 = vmatprep.mubr.bf16.mxu0 0
        %705 = vmatmul.mubr.bf16.gmra.mxu0 %v642
        %v706 = vpop.f32.mrf.mxu0
        %v707 = vadd.f32 0.0, %v706
        %v708 = vpop.f32.mrf.mxu0
        %v709 = vadd.f32 0.0, %v708
        %v710 = vpop.f32.mrf.mxu0
        %v711 = vadd.f32 0.0, %v710
        %v712 = vpop.f32.mrf.mxu0
        %v713 = vadd.f32 0.0, %v712
        %714 = vmatprep.mubr.bf16.mxu0 0
        %715 = vmatmul.mubr.bf16.gmra.mxu0 %v645
        %v716 = vpop.f32.mrf.mxu0
        %v717 = vadd.f32 0.0, %v716
        %v718 = vpop.f32.mrf.mxu0
        %v719 = vadd.f32 0.0, %v718
        %v720 = vpop.f32.mrf.mxu0
        %v721 = vadd.f32 0.0, %v720
        %v722 = vpop.f32.mrf.mxu0
        %v723 = vadd.f32 0.0, %v722
        %724 = vmatprep.mubr.bf16.mxu0 0
        %725 = vmatmul.mubr.bf16.gmra.mxu0 %v648
        %v726 = vpop.f32.mrf.mxu0
        %v727 = vadd.f32 0.0, %v726
        %v728 = vpop.f32.mrf.mxu0
        %v729 = vadd.f32 0.0, %v728
        %v730 = vpop.f32.mrf.mxu0
        %v731 = vadd.f32 0.0, %v730
        %v732 = vpop.f32.mrf.mxu0
        %v733 = vadd.f32 0.0, %v732
        %734 = vmatprep.mubr.bf16.mxu0 0
        %735 = vmatmul.mubr.bf16.gmra.mxu0 %v651
        %v736 = vpop.f32.mrf.mxu0
        %v737 = vadd.f32 0.0, %v736
        %v738 = vpop.f32.mrf.mxu0
        %v739 = vadd.f32 0.0, %v738
        %v740 = vpop.f32.mrf.mxu0
        %v741 = vadd.f32 0.0, %v740
        %v742 = vpop.f32.mrf.mxu0
        %v743 = vadd.f32 0.0, %v742
        %744 = vmatprep.mubr.bf16.mxu0 0
        %745 = vmatmul.mubr.bf16.gmra.mxu0 %v654
        %v746 = vpop.f32.mrf.mxu0
        %v747 = vadd.f32 0.0, %v746
        %v748 = vpop.f32.mrf.mxu0
        %v749 = vadd.f32 0.0, %v748
        %v750 = vpop.f32.mrf.mxu0
        %v751 = vadd.f32 0.0, %v750
        %v752 = vpop.f32.mrf.mxu0
        %v753 = vadd.f32 0.0, %v752
        %754 = vmatprep.mubr.bf16.mxu0 0
        %755 = vmatmul.mubr.bf16.gmra.mxu0 %v657
        %v756 = vpop.f32.mrf.mxu0
        %v757 = vadd.f32 0.0, %v756
        %v758 = vpop.f32.mrf.mxu0
        %v759 = vadd.f32 0.0, %v758
        %v760 = vpop.f32.mrf.mxu0
        %v761 = vadd.f32 0.0, %v760
        %v762 = vpop.f32.mrf.mxu0
        %v763 = vadd.f32 0.0, %v762
        %764 = vmatprep.mubr.bf16.mxu0 0
        %765 = vmatmul.mubr.bf16.gmra.mxu0 %v660
        %v766 = vpop.f32.mrf.mxu0
        %v767 = vadd.f32 0.0, %v766
        %v768 = vpop.f32.mrf.mxu0
        %v769 = vadd.f32 0.0, %v768
        %v770 = vpop.f32.mrf.mxu0
        %v771 = vadd.f32 0.0, %v770
        %v772 = vpop.f32.mrf.mxu0
        %v773 = vadd.f32 0.0, %v772
        %774 = vdwg.mxu0
        %v775 = vpack.c.bf16 %v701, %v697
        %v776 = vpack.c.bf16 %v703, %v699
        %v777 = vpack.c.bf16 %v711, %v707
        %v778 = vpack.c.bf16 %v713, %v709
        %v779 = vpack.c.bf16 %v721, %v717
        %v780 = vpack.c.bf16 %v723, %v719
        %v781 = vpack.c.bf16 %v731, %v727
        %v782 = vpack.c.bf16 %v733, %v729
        %v783 = vpack.c.bf16 %v741, %v737
        %v784 = vpack.c.bf16 %v743, %v739
        %v785 = vpack.c.bf16 %v751, %v747
        %v786 = vpack.c.bf16 %v753, %v749
        %v787 = vpack.c.bf16 %v761, %v757
        %v788 = vpack.c.bf16 %v763, %v759
        %v789 = vpack.c.bf16 %v771, %v767
        %v790 = vpack.c.bf16 %v773, %v769
        %v807 = vunpack.c.l.b16 %v775
        %v808 = vunpack.c.l.b16 %v776
        %v809 = vunpack.c.h.b16 %v775
        %v810 = vunpack.c.h.b16 %v776
        %v811 = vunpack.c.l.b16 %v777
        %v812 = vunpack.c.l.b16 %v778
        %v813 = vunpack.c.h.b16 %v777
        %v814 = vunpack.c.h.b16 %v778
        %v815 = vunpack.c.l.b16 %v779
        %v816 = vunpack.c.l.b16 %v780
        %v817 = vunpack.c.h.b16 %v779
        %v818 = vunpack.c.h.b16 %v780
        %v819 = vunpack.c.l.b16 %v781
        %v820 = vunpack.c.l.b16 %v782
        %v821 = vunpack.c.h.b16 %v781
        %v822 = vunpack.c.h.b16 %v782
        %v823 = vunpack.c.l.b16 %v783
        %v824 = vunpack.c.l.b16 %v784
        %v825 = vunpack.c.h.b16 %v783
        %v826 = vunpack.c.h.b16 %v784
        %v827 = vunpack.c.l.b16 %v785
        %v828 = vunpack.c.l.b16 %v786
        %v829 = vunpack.c.h.b16 %v785
        %v830 = vunpack.c.h.b16 %v786
        %v831 = vunpack.c.l.b16 %v787
        %v832 = vunpack.c.l.b16 %v788
        %v833 = vunpack.c.h.b16 %v787
        %v834 = vunpack.c.h.b16 %v788
        %v835 = vunpack.c.l.b16 %v789
        %v836 = vunpack.c.l.b16 %v790
        %v837 = vunpack.c.h.b16 %v789
        %v838 = vunpack.c.h.b16 %v790
        %v839 = vpack.c.b16 %v808, %v807
        %v840 = vpack.c.b16 %v810, %v809
        %v841 = vpack.c.b16 %v812, %v811
        %v842 = vpack.c.b16 %v814, %v813
        %v843 = vpack.c.b16 %v816, %v815
        %v844 = vpack.c.b16 %v818, %v817
        %v845 = vpack.c.b16 %v820, %v819
        %v846 = vpack.c.b16 %v822, %v821
        %v847 = vpack.c.b16 %v824, %v823
        %v848 = vpack.c.b16 %v826, %v825
        %v849 = vpack.c.b16 %v828, %v827
        %v850 = vpack.c.b16 %v830, %v829
        %v851 = vpack.c.b16 %v832, %v831
        %v852 = vpack.c.b16 %v834, %v833
        %v853 = vpack.c.b16 %v836, %v835
        %v854 = vpack.c.b16 %v838, %v837
        %871 = vst [vmem:[%s230] sm:$0xff] %v839
        %872 = vst [vmem:[%s230 + $0x8] sm:$0xff] %v840
        %873 = vst [vmem:[%s230 + $0x10] sm:$0xff] %v841
        %874 = vst [vmem:[%s230 + $0x18] sm:$0xff] %v842
        %875 = vst [vmem:[%s230 + $0x20] sm:$0xff] %v843
        %876 = vst [vmem:[%s230 + $0x28] sm:$0xff] %v844
        %877 = vst [vmem:[%s230 + $0x30] sm:$0xff] %v845
        %878 = vst [vmem:[%s230 + $0x38] sm:$0xff] %v846
        %879 = vst [vmem:[%s230 + $0x40] sm:$0xff] %v847
        %880 = vst [vmem:[%s230 + $0x48] sm:$0xff] %v848
        %881 = vst [vmem:[%s230 + $0x50] sm:$0xff] %v849
        %882 = vst [vmem:[%s230 + $0x58] sm:$0xff] %v850
        %883 = vst [vmem:[%s230 + $0x60] sm:$0xff] %v851
        %884 = vst [vmem:[%s230 + $0x68] sm:$0xff] %v852
        %885 = vst [vmem:[%s230 + $0x70] sm:$0xff] %v853
        %886 = vst [vmem:[%s230 + $0x78] sm:$0xff] %v854
        %v887 = vld [vmem:[%s1 + $0x80] sm:$0xf]
        %v888 = vld [vmem:[%s1 + $0x84] sm:$0xf]
        %v889 = vld [vmem:[%s1 + $0x88] sm:$0xf]
        %v890 = vld [vmem:[%s1 + $0x8c] sm:$0xf]
        %v891 = vld [vmem:[%s1 + $0x90] sm:$0xf]
        %v892 = vld [vmem:[%s1 + $0x94] sm:$0xf]
        %v893 = vld [vmem:[%s1 + $0x98] sm:$0xf]
        %v894 = vld [vmem:[%s1 + $0x9c] sm:$0xf]
        %v895 = vld [vmem:[%s1 + $0xa0] sm:$0xf]
        %v896 = vld [vmem:[%s1 + $0xa4] sm:$0xf]
        %v897 = vld [vmem:[%s1 + $0xa8] sm:$0xf]
        %v898 = vld [vmem:[%s1 + $0xac] sm:$0xf]
        %v899 = vld [vmem:[%s1 + $0xb0] sm:$0xf]
        %v900 = vld [vmem:[%s1 + $0xb4] sm:$0xf]
        %v901 = vld [vmem:[%s1 + $0xb8] sm:$0xf]
        %v902 = vld [vmem:[%s1 + $0xbc] sm:$0xf]
        %v919 = vunpack.c.l.b16 %v887
        %v920 = vunpack.c.l.b16 %v888
        %v921 = vunpack.c.l.b16 %v889
        %v922 = vunpack.c.l.b16 %v890
        %v923 = vunpack.c.l.b16 %v891
        %v924 = vunpack.c.l.b16 %v892
        %v925 = vunpack.c.l.b16 %v893
        %v926 = vunpack.c.l.b16 %v894
        %v927 = vunpack.c.l.b16 %v895
        %v928 = vunpack.c.l.b16 %v896
        %v929 = vunpack.c.l.b16 %v897
        %v930 = vunpack.c.l.b16 %v898
        %v931 = vunpack.c.l.b16 %v899
        %v932 = vunpack.c.l.b16 %v900
        %v933 = vunpack.c.l.b16 %v901
        %v934 = vunpack.c.l.b16 %v902
        %v935 = vpack.c.b16 %v920, %v919
        %v936 = vpack.c.b16 %v922, %v921
        %v937 = vpack.c.b16 %v924, %v923
        %v938 = vpack.c.b16 %v926, %v925
        %v939 = vpack.c.b16 %v928, %v927
        %v940 = vpack.c.b16 %v930, %v929
        %v941 = vpack.c.b16 %v932, %v931
        %v942 = vpack.c.b16 %v934, %v933
        %v944 = vsel %vm332, %v935, 0
        %v947 = vsel %vm332, %v936, 0
        %v950 = vsel %vm332, %v937, 0
        %v953 = vsel %vm332, %v938, 0
        %v956 = vsel %vm332, %v939, 0
        %v959 = vsel %vm332, %v940, 0
        %v962 = vsel %vm332, %v941, 0
        %v965 = vsel %vm332, %v942, 0
        %967 = vmatprep.subr.bf16.mxu0 0
        %968 = vmatpush1.bf16.msra.mxu0 0
        %969 = vmatprep.subr.bf16.mxu0 0
        %970 = vmatpush1.bf16.msra.mxu0 0
        %971 = vmatprep.subr.bf16.mxu0 0
        %972 = vmatpush1.bf16.msra.mxu0 0
        %973 = vmatprep.subr.bf16.mxu0 0
        %974 = vmatpush1.bf16.msra.mxu0 0
        %975 = vmatprep.subr.bf16.mxu0 0
        %976 = vmatpush1.bf16.msra.mxu0 0
        %977 = vmatprep.subr.bf16.mxu0 0
        %978 = vmatpush1.bf16.msra.mxu0 0
        %979 = vmatprep.subr.bf16.mxu0 %v327
        %980 = vmatpush1.bf16.msra.mxu0 %v326
        %981 = vmatprep.subr.bf16.mxu0 %v325
        %982 = vmatpush1.bf16.msra.mxu0 %v324
        %983 = vmatprep.subr.bf16.mxu0 0
        %984 = vmatpush2.bf16.msra.mxu0 0
        %985 = vmatprep.subr.bf16.mxu0 0
        %986 = vmatpush2.bf16.msra.mxu0 0
        %987 = vmatprep.subr.bf16.mxu0 0
        %988 = vmatpush2.bf16.msra.mxu0 0
        %989 = vmatprep.subr.bf16.mxu0 0
        %990 = vmatpush2.bf16.msra.mxu0 0
        %991 = vmatprep.subr.bf16.mxu0 0
        %992 = vmatpush2.bf16.msra.mxu0 0
        %993 = vmatprep.subr.bf16.mxu0 0
        %994 = vmatpush2.bf16.msra.mxu0 0
        %995 = vmatprep.subr.bf16.mxu0 0
        %996 = vmatpush2.bf16.msra.mxu0 0
        %997 = vmatprep.subr.bf16.mxu0 0
        %998 = vmatpush2.bf16.msra.mxu0 0
        %999 = vmatprep.mubr.bf16.mxu0 0
        %1000 = vmatmul.mubr.bf16.gmra.mxu0 %v944
        %v1001 = vpop.f32.mrf.mxu0
        %v1002 = vadd.f32 0.0, %v1001
        %v1003 = vpop.f32.mrf.mxu0
        %v1004 = vadd.f32 0.0, %v1003
        %v1005 = vpop.f32.mrf.mxu0
        %v1006 = vadd.f32 0.0, %v1005
        %v1007 = vpop.f32.mrf.mxu0
        %v1008 = vadd.f32 0.0, %v1007
        %1009 = vmatprep.mubr.bf16.mxu0 0
        %1010 = vmatmul.mubr.bf16.gmra.mxu0 %v947
        %v1011 = vpop.f32.mrf.mxu0
        %v1012 = vadd.f32 0.0, %v1011
        %v1013 = vpop.f32.mrf.mxu0
        %v1014 = vadd.f32 0.0, %v1013
        %v1015 = vpop.f32.mrf.mxu0
        %v1016 = vadd.f32 0.0, %v1015
        %v1017 = vpop.f32.mrf.mxu0
        %v1018 = vadd.f32 0.0, %v1017
        %1019 = vmatprep.mubr.bf16.mxu0 0
        %1020 = vmatmul.mubr.bf16.gmra.mxu0 %v950
        %v1021 = vpop.f32.mrf.mxu0
        %v1022 = vadd.f32 0.0, %v1021
        %v1023 = vpop.f32.mrf.mxu0
        %v1024 = vadd.f32 0.0, %v1023
        %v1025 = vpop.f32.mrf.mxu0
        %v1026 = vadd.f32 0.0, %v1025
        %v1027 = vpop.f32.mrf.mxu0
        %v1028 = vadd.f32 0.0, %v1027
        %1029 = vmatprep.mubr.bf16.mxu0 0
        %1030 = vmatmul.mubr.bf16.gmra.mxu0 %v953
        %v1031 = vpop.f32.mrf.mxu0
        %v1032 = vadd.f32 0.0, %v1031
        %v1033 = vpop.f32.mrf.mxu0
        %v1034 = vadd.f32 0.0, %v1033
        %v1035 = vpop.f32.mrf.mxu0
        %v1036 = vadd.f32 0.0, %v1035
        %v1037 = vpop.f32.mrf.mxu0
        %v1038 = vadd.f32 0.0, %v1037
        %1039 = vmatprep.mubr.bf16.mxu0 0
        %1040 = vmatmul.mubr.bf16.gmra.mxu0 %v956
        %v1041 = vpop.f32.mrf.mxu0
        %v1042 = vadd.f32 0.0, %v1041
        %v1043 = vpop.f32.mrf.mxu0
        %v1044 = vadd.f32 0.0, %v1043
        %v1045 = vpop.f32.mrf.mxu0
        %v1046 = vadd.f32 0.0, %v1045
        %v1047 = vpop.f32.mrf.mxu0
        %v1048 = vadd.f32 0.0, %v1047
        %1049 = vmatprep.mubr.bf16.mxu0 0
        %1050 = vmatmul.mubr.bf16.gmra.mxu0 %v959
        %v1051 = vpop.f32.mrf.mxu0
        %v1052 = vadd.f32 0.0, %v1051
        %v1053 = vpop.f32.mrf.mxu0
        %v1054 = vadd.f32 0.0, %v1053
        %v1055 = vpop.f32.mrf.mxu0
        %v1056 = vadd.f32 0.0, %v1055
        %v1057 = vpop.f32.mrf.mxu0
        %v1058 = vadd.f32 0.0, %v1057
        %1059 = vmatprep.mubr.bf16.mxu0 0
        %1060 = vmatmul.mubr.bf16.gmra.mxu0 %v962
        %v1061 = vpop.f32.mrf.mxu0
        %v1062 = vadd.f32 0.0, %v1061
        %v1063 = vpop.f32.mrf.mxu0
        %v1064 = vadd.f32 0.0, %v1063
        %v1065 = vpop.f32.mrf.mxu0
        %v1066 = vadd.f32 0.0, %v1065
        %v1067 = vpop.f32.mrf.mxu0
        %v1068 = vadd.f32 0.0, %v1067
        %1069 = vmatprep.mubr.bf16.mxu0 0
        %1070 = vmatmul.mubr.bf16.gmra.mxu0 %v965
        %v1071 = vpop.f32.mrf.mxu0
        %v1072 = vadd.f32 0.0, %v1071
        %v1073 = vpop.f32.mrf.mxu0
        %v1074 = vadd.f32 0.0, %v1073
        %v1075 = vpop.f32.mrf.mxu0
        %v1076 = vadd.f32 0.0, %v1075
        %v1077 = vpop.f32.mrf.mxu0
        %v1078 = vadd.f32 0.0, %v1077
        %1079 = vdwg.mxu0
        %v1080 = vpack.c.bf16 %v1006, %v1002
        %v1081 = vpack.c.bf16 %v1008, %v1004
        %v1082 = vpack.c.bf16 %v1016, %v1012
        %v1083 = vpack.c.bf16 %v1018, %v1014
        %v1084 = vpack.c.bf16 %v1026, %v1022
        %v1085 = vpack.c.bf16 %v1028, %v1024
        %v1086 = vpack.c.bf16 %v1036, %v1032
        %v1087 = vpack.c.bf16 %v1038, %v1034
        %v1088 = vpack.c.bf16 %v1046, %v1042
        %v1089 = vpack.c.bf16 %v1048, %v1044
        %v1090 = vpack.c.bf16 %v1056, %v1052
        %v1091 = vpack.c.bf16 %v1058, %v1054
        %v1092 = vpack.c.bf16 %v1066, %v1062
        %v1093 = vpack.c.bf16 %v1068, %v1064
        %v1094 = vpack.c.bf16 %v1076, %v1072
        %v1095 = vpack.c.bf16 %v1078, %v1074
        %v1112 = vunpack.c.l.b16 %v1080
        %v1113 = vunpack.c.l.b16 %v1081
        %v1114 = vunpack.c.h.b16 %v1080
        %v1115 = vunpack.c.h.b16 %v1081
        %v1116 = vunpack.c.l.b16 %v1082
        %v1117 = vunpack.c.l.b16 %v1083
        %v1118 = vunpack.c.h.b16 %v1082
        %v1119 = vunpack.c.h.b16 %v1083
        %v1120 = vunpack.c.l.b16 %v1084
        %v1121 = vunpack.c.l.b16 %v1085
        %v1122 = vunpack.c.h.b16 %v1084
        %v1123 = vunpack.c.h.b16 %v1085
        %v1124 = vunpack.c.l.b16 %v1086
        %v1125 = vunpack.c.l.b16 %v1087
        %v1126 = vunpack.c.h.b16 %v1086
        %v1127 = vunpack.c.h.b16 %v1087
        %v1128 = vunpack.c.l.b16 %v1088
        %v1129 = vunpack.c.l.b16 %v1089
        %v1130 = vunpack.c.h.b16 %v1088
        %v1131 = vunpack.c.h.b16 %v1089
        %v1132 = vunpack.c.l.b16 %v1090
        %v1133 = vunpack.c.l.b16 %v1091
        %v1134 = vunpack.c.h.b16 %v1090
        %v1135 = vunpack.c.h.b16 %v1091
        %v1136 = vunpack.c.l.b16 %v1092
        %v1137 = vunpack.c.l.b16 %v1093
        %v1138 = vunpack.c.h.b16 %v1092
        %v1139 = vunpack.c.h.b16 %v1093
        %v1140 = vunpack.c.l.b16 %v1094
        %v1141 = vunpack.c.l.b16 %v1095
        %v1142 = vunpack.c.h.b16 %v1094
        %v1143 = vunpack.c.h.b16 %v1095
        %v1144 = vpack.c.b16 %v1113, %v1112
        %v1145 = vpack.c.b16 %v1115, %v1114
        %v1146 = vpack.c.b16 %v1117, %v1116
        %v1147 = vpack.c.b16 %v1119, %v1118
        %v1148 = vpack.c.b16 %v1121, %v1120
        %v1149 = vpack.c.b16 %v1123, %v1122
        %v1150 = vpack.c.b16 %v1125, %v1124
        %v1151 = vpack.c.b16 %v1127, %v1126
        %v1152 = vpack.c.b16 %v1129, %v1128
        %v1153 = vpack.c.b16 %v1131, %v1130
        %v1154 = vpack.c.b16 %v1133, %v1132
        %v1155 = vpack.c.b16 %v1135, %v1134
        %v1156 = vpack.c.b16 %v1137, %v1136
        %v1157 = vpack.c.b16 %v1139, %v1138
        %v1158 = vpack.c.b16 %v1141, %v1140
        %v1159 = vpack.c.b16 %v1143, %v1142
        %1176 = vst [vmem:[%s237] sm:$0xff] %v1144
        %1177 = vst [vmem:[%s237 + $0x8] sm:$0xff] %v1145
        %1178 = vst [vmem:[%s237 + $0x10] sm:$0xff] %v1146
        %1179 = vst [vmem:[%s237 + $0x18] sm:$0xff] %v1147
        %1180 = vst [vmem:[%s237 + $0x20] sm:$0xff] %v1148
        %1181 = vst [vmem:[%s237 + $0x28] sm:$0xff] %v1149
        %1182 = vst [vmem:[%s237 + $0x30] sm:$0xff] %v1150
        %1183 = vst [vmem:[%s237 + $0x38] sm:$0xff] %v1151
        %1184 = vst [vmem:[%s237 + $0x40] sm:$0xff] %v1152
        %1185 = vst [vmem:[%s237 + $0x48] sm:$0xff] %v1153
        %1186 = vst [vmem:[%s237 + $0x50] sm:$0xff] %v1154
        %1187 = vst [vmem:[%s237 + $0x58] sm:$0xff] %v1155
        %1188 = vst [vmem:[%s237 + $0x60] sm:$0xff] %v1156
        %1189 = vst [vmem:[%s237 + $0x68] sm:$0xff] %v1157
        %1190 = vst [vmem:[%s237 + $0x70] sm:$0xff] %v1158
        %1191 = vst [vmem:[%s237 + $0x78] sm:$0xff] %v1159
        %s1192 = sand.u32 %s93, 1
        %s1193 = scalar_lea.sflag [#allocation3], %s1192
        %s1194 = sand.u32 %s93, 1
        %s1195 = smul.addr %s1194, 128
        %s1196 = scalar_lea.vmem [#allocation2], %s1195
        %s1197 = sand.u32 %s22, 1
        %s1198 = scalar_lea.sflag [#allocation5], %s1197
        %s1199 = sand.u32 %s121, 1
        %s1200 = smul.addr %s1199, 128
        %s1201 = scalar_lea.vmem [#allocation4], %s1200
        %s1202 = sand.u32 %s22, 1
        %s1203 = scalar_lea.sflag [#allocation5], %s1202
        %s1204 = sand.u32 %s149, 1
        %s1205 = smul.addr %s1204, 128
        %s1206 = scalar_lea.vmem [#allocation6], %s1205
        // Predicated region
        $region29: #{tpu_custom_call.1} parent=27 // pred_check
          %p1207 = pneg %p103
        $region30: #{tpu_custom_call.1} parent=27 // pred_check_branch
          %1209 = sbr.rel (%p1207) target = $region32
        $region31: #{tpu_custom_call.1} parent=27 // pred_region
          %s1210 = smul.u32 2, %s27
          %s1212 = ssub.s32 2048, 2048
          %1213 = vsyncadd %s1193, %s1212
          %s1214 = smul.addr %s26, 32
          %s1215 = sadd.s32 %s1210, %s1214
          %s1216 = smul.addr %s1215, 64
          %s1217 = scalar_lea.hbm %s2, %s1216
          %s1218 = sshll.u32 %s1196, 4
          %s1219 = int_to_ptr.vmem [resolvable:$true] %s1218
          %1224 = dma.vmem_to_hbm [thread:$0]  %s1219, 2048, %s1217, %s1193, 128, 128, 8
        $region32: #{tpu_custom_call.1} parent=27 // pred_fallthru
          _
        // Predicated region
        $region33: #{tpu_custom_call.1} parent=27 // pred_check
          %p1225 = pneg %p131
        $region34: #{tpu_custom_call.1} parent=27 // pred_check_branch
          %1227 = sbr.rel (%p1225) target = $region36
        $region35: #{tpu_custom_call.1} parent=27 // pred_region
          %s1228 = smul.u32 2, %s27
          %s1230 = ssub.s32 2048, 2048
          %1231 = vsyncadd %s1198, %s1230
          %s1232 = smul.addr %s26, 32
          %s1233 = sadd.s32 %s1228, %s1232
          %s1234 = smul.addr %s1233, 64
          %s1235 = scalar_lea.hbm %s3, %s1234
          %s1236 = sshll.u32 %s1201, 4
          %s1237 = int_to_ptr.vmem [resolvable:$true] %s1236
          %1242 = dma.vmem_to_hbm [thread:$0]  %s1237, 2048, %s1235, %s1198, 128, 128, 8
        $region36: #{tpu_custom_call.1} parent=27 // pred_fallthru
          _
        // Predicated region
        $region37: #{tpu_custom_call.1} parent=27 // pred_check
          %p1243 = pneg %p159
        $region38: #{tpu_custom_call.1} parent=27 // pred_check_branch
          %1245 = sbr.rel (%p1243) target = $region40
        $region39: #{tpu_custom_call.1} parent=27 // pred_region
          %s1246 = smul.u32 2, %s27
          %s1248 = ssub.s32 2048, 2048
          %1249 = vsyncadd %s1203, %s1248
          %s1250 = smul.addr %s26, 32
          %s1251 = sadd.s32 %s1246, %s1250
          %s1252 = smul.addr %s1251, 64
          %s1253 = scalar_lea.hbm %s4, %s1252
          %s1254 = sshll.u32 %s1206, 4
          %s1255 = int_to_ptr.vmem [resolvable:$true] %s1254
          %1260 = dma.vmem_to_hbm [thread:$0]  %s1255, 2048, %s1253, %s1203, 128, 128, 8
        $region40: #{tpu_custom_call.1} parent=27 // pred_fallthru
          _
      $region28: #{tpu_custom_call.1} parent=5 // pred_fallthru
        _
      %p1261 = scmp.le.s32.totalorder 2, %s17
      // Predicated region
      $region41: #{tpu_custom_call.1} parent=5 // pred_check
        %p1262 = pneg %p1261
      $region42: #{tpu_custom_call.1} parent=5 // pred_check_branch
        %1264 = sbr.rel (%p1262) target = $region44
      $region43: #{tpu_custom_call.1} parent=5 // pred_region
        %s1265 = ssub.s32 %s17, 2
        // Predicated region
        $region45: #{tpu_custom_call.1} parent=43 // pred_check
          %p1266 = pneg %p109
        $region46: #{tpu_custom_call.1} parent=43 // pred_check_branch
          %1268 = sbr.rel (%p1266) target = $region48
        $region47: #{tpu_custom_call.1} parent=43 // pred_region
          %s1269 = sand.u32 %s94, 1
          %s1270 = scalar_lea.sflag [#allocation3], %s1269
          %s1271 = sand.u32 %s94, 1
          %s1272 = smul.addr %s1271, 128
          %s1273 = scalar_lea.vmem [#allocation2], %s1272
          %1274 = dma.done %s1270, 2048
        $region48: #{tpu_custom_call.1} parent=43 // pred_fallthru
          _
        // Predicated region
        $region49: #{tpu_custom_call.1} parent=43 // pred_check
          %p1275 = pneg %p137
        $region50: #{tpu_custom_call.1} parent=43 // pred_check_branch
          %1277 = sbr.rel (%p1275) target = $region52
        $region51: #{tpu_custom_call.1} parent=43 // pred_region
          %s1278 = sand.u32 %s23, 1
          %s1279 = scalar_lea.sflag [#allocation5], %s1278
          %s1280 = sand.u32 %s122, 1
          %s1281 = smul.addr %s1280, 128
          %s1282 = scalar_lea.vmem [#allocation4], %s1281
          %1283 = dma.done %s1279, 2048
        $region52: #{tpu_custom_call.1} parent=43 // pred_fallthru
          _
        // Predicated region
        $region53: #{tpu_custom_call.1} parent=43 // pred_check
          %p1284 = pneg %p165
        $region54: #{tpu_custom_call.1} parent=43 // pred_check_branch
          %1286 = sbr.rel (%p1284) target = $region56
        $region55: #{tpu_custom_call.1} parent=43 // pred_region
          %s1287 = sand.u32 %s23, 1
          %s1288 = scalar_lea.sflag [#allocation5], %s1287
          %s1289 = sand.u32 %s150, 1
          %s1290 = smul.addr %s1289, 128
          %s1291 = scalar_lea.vmem [#allocation6], %s1290
          %1292 = dma.done %s1288, 2048
        $region56: #{tpu_custom_call.1} parent=43 // pred_fallthru
          _
      $region44: #{tpu_custom_call.1} parent=5 // pred_fallthru
        _
    $region6: #{tpu_custom_call.1} parent=1 // loop_footer
      %s21 = sadd.s32 1, %s17
    $region7: #{tpu_custom_call.1} parent=1 // loop_footer_branch
      %16 = sbr.rel target = $region3
    $region8: #{tpu_custom_call.1} parent=1 // loop_exit
      _
    %1293 = vsyncpa [#allocation3], 1
    %s1294 = scalar_lea.sflag [#allocation3], 1
    %1295 = vsyncpa %s1294, 1
    %1296 = vsyncpa [#allocation5], 1
    %s1297 = scalar_lea.sflag [#allocation5], 1
    %1298 = vsyncpa %s1297, 1

</llo_original>
